<compile_context>
chip_gen: v5e
topology: v5e:2x2
jax: 0.10.0
libtpu: 0.0.40
codegen_flags: <defaults>
</compile_context>

<pallas_src>
import functools

import jax
import jax.numpy as jnp
from jax.experimental import pallas as pl
from jax.experimental.pallas import tpu as pltpu


def _round_up(x: int, m: int) -> int:
    return ((x + m - 1) // m) * m


def _linear_kernel(x_ref, w_ref, b_ref, o_ref, acc_ref):
    # x_ref : (tm, tk)  VMEM   flattened-input tile
    # w_ref : (tn, tk)  VMEM   weight tile in PyTorch (D_out, D_in) layout
    # b_ref : (1,  tn)  VMEM   bias tile (per N column block)
    # o_ref : (tm, tn)  VMEM   output tile
    # acc_ref: (tm, tn) f32 VMEM scratch accumulator (lives across the K axis)
    k = pl.program_id(2)

    @pl.when(k == 0)
    def _init():
        acc_ref[...] = jnp.zeros_like(acc_ref)

    # Contract dim 1 of x (K) with dim 1 of w (K): x @ W^T without transposing.
    acc_ref[...] += jax.lax.dot_general(
        x_ref[...],
        w_ref[...],
        dimension_numbers=(((1,), (1,)), ((), ())),
        preferred_element_type=jnp.float32,
    )

    @pl.when(k == pl.num_programs(2) - 1)
    def _finalize():
        o_ref[...] = (acc_ref[...] + b_ref[...].astype(jnp.float32)).astype(
            o_ref.dtype
        )


@functools.partial(jax.jit, static_argnames=())
def softmax_model_forward(x, weight, bias):
    """Forward pass of SoftmaxModel.

    x      : (B, C, H, W) (or any shape whose trailing dims multiply to D_in)
    weight : (D_out, D_in)   PyTorch nn.Linear layout — NOT transposed here
    bias   : (D_out,)
    returns: (B, D_out)
    """
    B = x.shape[0]
    D_out, D_in = weight.shape
    x2 = x.reshape(B, D_in)  # same flatten as np.reshape in the torch forward

    # ---- Tile sizes (clamped so they fit every generation's VMEM budget) ----
    tm = min(256, _round_up(B, 8))        # sublane-aligned M tile
    tn = min(256, _round_up(D_out, 128))  # lane-dense N tile (>=128)
    tk = min(512, _round_up(D_in, 128))   # K reduction tile

    M_pad = _round_up(B, tm)
    N_pad = _round_up(D_out, tn)
    K_pad = _round_up(D_in, tk)

    # ---- Zero-pad to tile multiples (padding contributes 0 to the matmul) ---
    if (M_pad, K_pad) != (B, D_in):
        x2 = jnp.pad(x2, ((0, M_pad - B), (0, K_pad - D_in)))
    w = weight
    if (N_pad, K_pad) != (D_out, D_in):
        w = jnp.pad(w, ((0, N_pad - D_out), (0, K_pad - D_in)))
    b2 = bias
    if N_pad != D_out:
        b2 = jnp.pad(b2, (0, N_pad - D_out))
    b2 = b2.reshape(1, N_pad)

    grid = (M_pad // tm, N_pad // tn, K_pad // tk)

    cost = pl.CostEstimate(
        flops=2 * M_pad * N_pad * K_pad,
        transcendentals=0,
        bytes_accessed=(
            x2.size * x2.dtype.itemsize
            + w.size * w.dtype.itemsize
            + b2.size * b2.dtype.itemsize
            + M_pad * N_pad * x2.dtype.itemsize
        ),
    )

    out_padded = pl.pallas_call(
        _linear_kernel,
        out_shape=jax.ShapeDtypeStruct((M_pad, N_pad), x2.dtype),
        grid_spec=pltpu.PrefetchScalarGridSpec(
            num_scalar_prefetch=0,
            grid=grid,
            in_specs=[
                pl.BlockSpec((tm, tk), lambda i, j, k: (i, k)),   # x tile
                pl.BlockSpec((tn, tk), lambda i, j, k: (j, k)),   # W tile (D_out, D_in)
                pl.BlockSpec((1, tn), lambda i, j, k: (0, j)),    # bias per N block
            ],
            out_specs=pl.BlockSpec((tm, tn), lambda i, j, k: (i, j)),
            scratch_shapes=[pltpu.VMEM((tm, tn), jnp.float32)],
        ),
        compiler_params=pltpu.CompilerParams(
            dimension_semantics=("parallel", "parallel", "arbitrary"),
        ),
        cost_estimate=cost,
    )(x2, w, b2)

    return out_padded[:B, :D_out]


if __name__ == "__main__":
    # Small shapes consistent with the module: x = (2, 4, 16, 16) -> D_in = 1024
    B, C, H, W = 2, 4, 16, 16
    D_in = C * H * W
    D_out = 32

    key = jax.random.PRNGKey(0)
    kx, kw, kb = jax.random.split(key, 3)

    x = jax.random.normal(kx, (B, C, H, W), dtype=jnp.float32)

    # Deterministic init mimicking nn.Linear's U(-1/sqrt(D_in), 1/sqrt(D_in))
    bound = 1.0 / jnp.sqrt(jnp.float32(D_in))
    weight = jax.random.uniform(
        kw, (D_out, D_in), dtype=jnp.float32, minval=-bound, maxval=bound
    )
    bias = jax.random.uniform(
        kb, (D_out,), dtype=jnp.float32, minval=-bound, maxval=bound
    )

    out = softmax_model_forward(x, weight, bias)
    out = jax.block_until_ready(out)

    # Pure-JAX reference check
    ref = x.reshape(B, D_in) @ weight.T + bias
    assert out.shape == (B, D_out)
    assert jnp.allclose(out, ref, atol=1e-5, rtol=1e-5)

    # TODO(synk): the PyTorch forward applies no softmax despite the class
    # name; if one is added upstream, fuse exp/sum/reciprocal into the
    # k==last epilogue of _linear_kernel.
    print("KERNEL_OK")
</pallas_src>

<mosaic_0001>
module attributes {stable_mosaic.version = 11 : i64} {
  func.func @_linear_kernel(%arg0: i32, %arg1: i32, %arg2: i32, %arg3: memref<8x512xf32, #tpu.memory_space<vmem>>, %arg4: memref<128x512xf32, #tpu.memory_space<vmem>>, %arg5: memref<1x128xf32, #tpu.memory_space<vmem>>, %arg6: memref<8x128xf32, #tpu.memory_space<vmem>>, %arg7: memref<8x128xf32, #tpu.memory_space<vmem>>) attributes {dimension_semantics = [#tpu.dimension_semantics<parallel>, #tpu.dimension_semantics<parallel>, #tpu.dimension_semantics<arbitrary>], iteration_bounds = array<i64: 1, 1, 2>, scalar_prefetch = 0 : i64, scratch_operands = 1 : i64, tpu.core_type = #tpu.core_type<tc>, window_params = [{transform_indices = @transform_0, window_bounds = array<i64: 8, 512>}, {transform_indices = @transform_1, window_bounds = array<i64: 128, 512>}, {transform_indices = @transform_2, window_bounds = array<i64: 1, 128>}, {transform_indices = @transform_3, window_bounds = array<i64: 8, 128>}]} {
    %c0_i32 = arith.constant 0 : i32
    %0 = arith.cmpi eq, %arg2, %c0_i32 : i32
    %1 = arith.extui %0 : i1 to i32
    %c0_i32_0 = arith.constant 0 : i32
    %2 = arith.cmpi ne, %1, %c0_i32_0 : i32
    scf.if %2 {
      %cst_9 = arith.constant 0.000000e+00 : f32
      %12 = vector.broadcast %cst_9 : f32 to vector<8x128xf32>
      %c0_10 = arith.constant 0 : index
      %c0_11 = arith.constant 0 : index
      %13 = vector.load %arg7[%c0_10, %c0_11] : memref<8x128xf32, #tpu.memory_space<vmem>>, vector<8x128xf32>
      tpu.vector_store %arg7[%c0_10, %c0_11], %12 {strides = array<i32>} : memref<8x128xf32, #tpu.memory_space<vmem>>, vector<8x128xf32>,
    } else {
    }
    %c0 = arith.constant 0 : index
    %c0_1 = arith.constant 0 : index
    %3 = vector.load %arg7[%c0, %c0_1] : memref<8x128xf32, #tpu.memory_space<vmem>>, vector<8x128xf32>
    %c0_2 = arith.constant 0 : index
    %c0_3 = arith.constant 0 : index
    %4 = vector.load %arg3[%c0_2, %c0_3] : memref<8x512xf32, #tpu.memory_space<vmem>>, vector<8x512xf32>
    %c0_4 = arith.constant 0 : index
    %c0_5 = arith.constant 0 : index
    %5 = vector.load %arg4[%c0_4, %c0_5] : memref<128x512xf32, #tpu.memory_space<vmem>>, vector<128x512xf32>
    %cst = arith.constant dense<0.000000e+00> : vector<8x128xf32>
    %6 = tpu.matmul %4, %5, %cst {dimension_numbers = #tpu.dot_dimension_numbers<[1], [1], [0], [0], [0, 0, 1, 0], [], []>} : vector<8x512xf32>, vector<128x512xf32>, vector<8x128xf32> -> vector<8x128xf32>
    %7 = arith.addf %3, %6 : vector<8x128xf32>
    %c0_6 = arith.constant 0 : index
    %c0_7 = arith.constant 0 : index
    %8 = vector.load %arg7[%c0_6, %c0_7] : memref<8x128xf32, #tpu.memory_space<vmem>>, vector<8x128xf32>
    tpu.vector_store %arg7[%c0_6, %c0_7], %7 {strides = array<i32>} : memref<8x128xf32, #tpu.memory_space<vmem>>, vector<8x128xf32>,
    %c1_i32 = arith.constant 1 : i32
    %9 = arith.cmpi eq, %arg2, %c1_i32 : i32
    %10 = arith.extui %9 : i1 to i32
    %c0_i32_8 = arith.constant 0 : i32
    %11 = arith.cmpi ne, %10, %c0_i32_8 : i32
    scf.if %11 {
      %c0_9 = arith.constant 0 : index
      %c0_10 = arith.constant 0 : index
      %12 = vector.load %arg7[%c0_9, %c0_10] : memref<8x128xf32, #tpu.memory_space<vmem>>, vector<8x128xf32>
      %c0_11 = arith.constant 0 : index
      %c0_12 = arith.constant 0 : index
      %13 = vector.load %arg5[%c0_11, %c0_12] : memref<1x128xf32, #tpu.memory_space<vmem>>, vector<1x128xf32>
      %14 = vector.broadcast %13 : vector<1x128xf32> to vector<8x128xf32>
      %15 = arith.addf %12, %14 : vector<8x128xf32>
      %c0_13 = arith.constant 0 : index
      %c0_14 = arith.constant 0 : index
      %16 = vector.load %arg6[%c0_13, %c0_14] : memref<8x128xf32, #tpu.memory_space<vmem>>, vector<8x128xf32>
      tpu.vector_store %arg6[%c0_13, %c0_14], %15 {strides = array<i32>} : memref<8x128xf32, #tpu.memory_space<vmem>>, vector<8x128xf32>,
    } else {
    }
    return
  }
  func.func @transform_0(%arg0: i32, %arg1: i32, %arg2: i32) -> (i32, i32) {
    %c0_i32 = arith.constant 0 : i32
    return %arg0, %arg2 : i32, i32
  }
  func.func @transform_1(%arg0: i32, %arg1: i32, %arg2: i32) -> (i32, i32) {
    %c0_i32 = arith.constant 0 : i32
    return %arg1, %arg2 : i32, i32
  }
  func.func @transform_2(%arg0: i32, %arg1: i32, %arg2: i32) -> (i32, i32) {
    %c0_i32 = arith.constant 0 : i32
    %c0_i32_0 = arith.constant 0 : i32
    return %c0_i32, %arg1 : i32, i32
  }
  func.func @transform_3(%arg0: i32, %arg1: i32, %arg2: i32) -> (i32, i32) {
    %c0_i32 = arith.constant 0 : i32
    return %arg0, %arg1 : i32, i32
  }
}

</mosaic_0001>

<llo_original>
// kernel: softmax_model_forward.1
$region0: #{softmax_model_forward.1}
  #allocation0 [shape = 'u32[]', space=smem, size = 0x4, offset = 0x4, fixed_abs, tag = 'smem constant byte address 0x4 - core index']
  #allocation1 [shape = 'u32[72,128]{1,0:T(1,128)}', space=vmem, size = 0x9000, scoped, tag = 'internal scratch']
  #allocation2 [shape = 'f32[8,128]{1,0:T(8,128)}', space=vmem, size = 0x1000, scoped, tag = 'scratch operand']
  %s0 = inlined_call_operand.vmem [shape: f32[8,1024], index: 0, kind: input, shape index: {}]
  %s1 = inlined_call_operand.vmem [shape: f32[128,1024], index: 1, kind: input, shape index: {}]
  %s2 = inlined_call_operand.vmem [shape: f32[1,128], index: 2, kind: input, shape index: {}]
  %s3 = inlined_call_operand.vmem [shape: f32[8,128], index: 3, kind: output, shape index: {}]
  %s4 = sld [smem:[#allocation0]]
  $region76: #{softmax_model_forward.1} parent=0
    _
  %s6 = ssub.s32 1, %s4
  %s7 = scalar_select 0, %s6, %s4
  $region1: #{softmax_model_forward.1} parent=0
    #allocation3 [shape = 'u8[524288]{0}', space=vmem, size = 0x80000, scoped, tag = 'input window, operand 1']
    loop: start=0, step=1, limit=4
    $region2: #{softmax_model_forward.1} parent=1 // loop_pre_header
      _
    $region3: #{softmax_model_forward.1} parent=1 // loop_header
      %s9 = sphi 0, %s13
      %p10 = scmp.ge.s32.totalorder %s9, 4
      %s16 = sphi 0, %s35
      %s17 = sphi 0, %s31
      %s18 = sphi 0, %s27
      %s19 = sphi 0, %s16
      %s20 = sphi 0, %s17
      %s21 = sphi 0, %s18
      %s22 = sphi 0, %s19
      %s23 = sphi 0, %s20
      %s24 = sphi 0, %s21
      %s40 = sphi 0, %s42
      %s43 = sphi 0, %s40
      %s44 = sphi 0, %s43
      %s60 = sphi 0, %s44
      %s68 = sphi 0, %s70
      %s71 = sphi 0, %s68
      %s72 = sphi 0, %s71
      %s88 = sphi 0, %s72
      %s94 = sphi 0, %s96
      %s97 = sphi 0, %s94
      %s98 = sphi 0, %s97
      %s114 = sphi 0, %s98
      %s122 = sphi 0, %s124
      %s125 = sphi 0, %s122
      %s126 = sphi 0, %s125
      %s142 = sphi 0, %s126
    $region4: #{softmax_model_forward.1} parent=1 // loop_header_branch
      %12 = sbr.rel (%p10) target = $region8
    $region5: #{softmax_model_forward.1} parent=1 // loop_body
      %s14 = ssub.s32 %s9, 1
      %s15 = ssub.s32 %s9, 2
      %s25 = sadd.s32 1, %s18
      %p26 = scmp.ge.s32.totalorder %s25, 2
      %s27 = scalar_select %p26, 0, %s25
      %s28 = sadd.s32 1, %s17
      %s29 = scalar_select %p26, %s28, %s17
      %p30 = scmp.ge.s32.totalorder %s29, 1
      %s31 = scalar_select %p30, 0, %s29
      %s32 = sadd.s32 1, %s16
      %s33 = scalar_select %p30, %s32, %s16
      %p34 = scmp.ge.s32.totalorder %s33, 1
      %s35 = scalar_select %p34, 0, %s33
      %s36 = ssub.s32 %s16, %s35
      %s37 = ssub.s32 %s18, %s27
      %s38 = sor.u32 %s36, %s37
      %p39 = scmp.eq.s32.totalorder %s38, 0
      %s41 = sadd.s32 %s40, 1
      %s42 = scalar_select %p39, %s40, %s41
      %p45 = pneg %p39
      %p46 = scmp.eq.s32.totalorder %s9, 1
      %p47 = por %p45, %p46
      %p48 = scmp.ne.s32.totalorder %s40, %s43
      %p49 = scmp.eq.s32.totalorder %s9, 0
      %p50 = por %p48, %p49
      %p51 = scmp.ne.s32.totalorder %s40, %s43
      %p52 = scmp.eq.s32.totalorder %s14, 1
      %p53 = por %p51, %p52
      %p54 = scmp.ne.s32.totalorder %s43, %s44
      %p55 = scmp.eq.s32.totalorder %s14, 0
      %p56 = por %p54, %p55
      %p57 = scmp.ne.s32.totalorder %s43, %s44
      %p58 = scmp.eq.s32.totalorder %s15, 1
      %p59 = por %p57, %p58
      %p61 = scmp.ne.s32.totalorder %s44, %s60
      %p62 = scmp.eq.s32.totalorder %s15, 0
      %p63 = por %p61, %p62
      %s64 = ssub.s32 %s17, %s31
      %s65 = ssub.s32 %s18, %s27
      %s66 = sor.u32 %s64, %s65
      %p67 = scmp.eq.s32.totalorder %s66, 0
      %s69 = sadd.s32 %s68, 1
      %s70 = scalar_select %p67, %s68, %s69
      %p73 = pneg %p67
      %p74 = scmp.eq.s32.totalorder %s9, 1
      %p75 = por %p73, %p74
      %p76 = scmp.ne.s32.totalorder %s68, %s71
      %p77 = scmp.eq.s32.totalorder %s9, 0
      %p78 = por %p76, %p77
      %p79 = scmp.ne.s32.totalorder %s68, %s71
      %p80 = scmp.eq.s32.totalorder %s14, 1
      %p81 = por %p79, %p80
      %p82 = scmp.ne.s32.totalorder %s71, %s72
      %p83 = scmp.eq.s32.totalorder %s14, 0
      %p84 = por %p82, %p83
      %p85 = scmp.ne.s32.totalorder %s71, %s72
      %p86 = scmp.eq.s32.totalorder %s15, 1
      %p87 = por %p85, %p86
      %p89 = scmp.ne.s32.totalorder %s72, %s88
      %p90 = scmp.eq.s32.totalorder %s15, 0
      %p91 = por %p89, %p90
      %s92 = ssub.s32 %s17, %s31
      %p93 = scmp.eq.s32.totalorder %s92, 0
      %s95 = sadd.s32 %s94, 1
      %s96 = scalar_select %p93, %s94, %s95
      %p99 = pneg %p93
      %p100 = scmp.eq.s32.totalorder %s9, 1
      %p101 = por %p99, %p100
      %p102 = scmp.ne.s32.totalorder %s94, %s97
      %p103 = scmp.eq.s32.totalorder %s9, 0
      %p104 = por %p102, %p103
      %p105 = scmp.ne.s32.totalorder %s94, %s97
      %p106 = scmp.eq.s32.totalorder %s14, 1
      %p107 = por %p105, %p106
      %p108 = scmp.ne.s32.totalorder %s97, %s98
      %p109 = scmp.eq.s32.totalorder %s14, 0
      %p110 = por %p108, %p109
      %p111 = scmp.ne.s32.totalorder %s97, %s98
      %p112 = scmp.eq.s32.totalorder %s15, 1
      %p113 = por %p111, %p112
      %p115 = scmp.ne.s32.totalorder %s98, %s114
      %p116 = scmp.eq.s32.totalorder %s15, 0
      %p117 = por %p115, %p116
      %s118 = ssub.s32 %s16, %s35
      %s119 = ssub.s32 %s17, %s31
      %s120 = sor.u32 %s118, %s119
      %p121 = scmp.eq.s32.totalorder %s120, 0
      %s123 = sadd.s32 %s122, 1
      %s124 = scalar_select %p121, %s122, %s123
      %p127 = pneg %p121
      %p128 = scmp.eq.s32.totalorder %s9, 1
      %p129 = por %p127, %p128
      %p130 = scmp.ne.s32.totalorder %s122, %s125
      %p131 = scmp.eq.s32.totalorder %s9, 0
      %p132 = por %p130, %p131
      %p133 = scmp.ne.s32.totalorder %s122, %s125
      %p134 = scmp.eq.s32.totalorder %s14, 1
      %p135 = por %p133, %p134
      %p136 = scmp.ne.s32.totalorder %s125, %s126
      %p137 = scmp.eq.s32.totalorder %s14, 0
      %p138 = por %p136, %p137
      %p139 = scmp.ne.s32.totalorder %s125, %s126
      %p140 = scmp.eq.s32.totalorder %s15, 1
      %p141 = por %p139, %p140
      %p143 = scmp.ne.s32.totalorder %s126, %s142
      %p144 = scmp.eq.s32.totalorder %s15, 0
      %p145 = por %p143, %p144
      %p146 = scmp.le.s32.totalorder 1, %s9
      %p147 = scmp.lt.s32.totalorder %s9, 3
      %p148 = pnand %p146, %p147
      %p149 = pneg %p148
      // Predicated region
      $region9: #{softmax_model_forward.1} parent=5 // pred_check
        _
      $region10: #{softmax_model_forward.1} parent=5 // pred_check_branch
        %151 = sbr.rel (%p148) target = $region12
      $region11: #{softmax_model_forward.1} parent=5 // pred_region
        %s152 = ssub.s32 %s9, 1
        // Predicated region
        $region13: #{softmax_model_forward.1} parent=11 // pred_check
          %p153 = pneg %p110
        $region14: #{softmax_model_forward.1} parent=11 // pred_check_branch
          %155 = sbr.rel (%p153) target = $region16
        $region15: #{softmax_model_forward.1} parent=11 // pred_region
          %p156 = scmp.lt.s32.totalorder %s20, 0
          %s157 = scalar_select %p156, %s20, 0
          %s158 = scalar_lea.vmem %s2, %s157
        $region16: #{softmax_model_forward.1} parent=11 // pred_fallthru
          _
      $region12: #{softmax_model_forward.1} parent=5 // pred_fallthru
        _
      %p159 = scmp.lt.s32.totalorder %s9, 2
      // Predicated region
      $region17: #{softmax_model_forward.1} parent=5 // pred_check
        %p160 = pneg %p159
      $region18: #{softmax_model_forward.1} parent=5 // pred_check_branch
        %162 = sbr.rel (%p160) target = $region20
      $region19: #{softmax_model_forward.1} parent=5 // pred_region
        // Predicated region
        $region21: #{softmax_model_forward.1} parent=19 // pred_check
          %p163 = pneg %p50
        $region22: #{softmax_model_forward.1} parent=19 // pred_check_branch
          %165 = sbr.rel (%p163) target = $region24
        $region23: #{softmax_model_forward.1} parent=19 // pred_region
          %s166 = smul.u32 4, %s18
          %p167 = scmp.lt.s32.totalorder %s16, 0
          %s168 = scalar_select %p167, %s16, 0
          %p169 = scmp.lt.s32.totalorder %s166, 7
          %s170 = scalar_select %p169, %s166, 7
          %s171 = smul.addr %s168, 8
          %s172 = sadd.s32 %s170, %s171
          %s173 = smul.addr %s172, 8
          %s174 = scalar_lea.vmem %s0, %s173
          %s175 = smul.u32 4, %s18
        $region24: #{softmax_model_forward.1} parent=19 // pred_fallthru
          _
        // Predicated region
        $region25: #{softmax_model_forward.1} parent=19 // pred_check
          %p176 = pneg %p78
        $region26: #{softmax_model_forward.1} parent=19 // pred_check_branch
          %178 = sbr.rel (%p176) target = $region28
        $region27: #{softmax_model_forward.1} parent=19 // pred_region
          %s179 = sand.u32 %s68, 1
          %s180 = sand.u32 %s68, 1
          %s181 = smul.addr %s180, 512
          %s182 = scalar_lea.vmem [#allocation3], %s181
          %s183 = smul.u32 16, %s17
          %s184 = smul.u32 4, %s18
          %s185 = smul.addr %s183, 8
          %s186 = sadd.s32 %s184, %s185
          %s187 = smul.addr %s186, 8
          %s188 = scalar_lea.vmem %s1, %s187
          // Predicated region
          $region29: #{softmax_model_forward.1} parent=27 // pred_check
            _
          $region30: #{softmax_model_forward.1} parent=27 // pred_check_branch
            %190 = sbr.rel (0) target = $region32
          $region31: #{softmax_model_forward.1} parent=27 // pred_region
            // Predicated region
            $region33: #{softmax_model_forward.1} parent=31 // pred_check
              _
            $region34: #{softmax_model_forward.1} parent=31 // pred_check_branch
              %192 = sbr.rel (0) target = $region36
            $region35: #{softmax_model_forward.1} parent=31 // pred_region
              loop: start=0, step=1, limit=1
              $region37: #{softmax_model_forward.1} parent=35 // loop_pre_header
                _
              $region38: #{softmax_model_forward.1} parent=35 // loop_header
                %s194 = sphi 0, %s198
                %p195 = scmp.ge.s32.totalorder %s194, 1
                %s199 = sphi %s188, %s188
                %s200 = sphi %s182, %s182
              $region39: #{softmax_model_forward.1} parent=35 // loop_header_branch
                %197 = sbr.rel (%p195) target = $region43
              $region40: #{softmax_model_forward.1} parent=35 // loop_body
                %v201 = vld [vmem:[%s199] sm:$0xff]
                %202 = vst [vmem:[%s200] sm:$0xff] %v201
                %v203 = vld [vmem:[%s199 + $0x8] sm:$0xff]
                %204 = vst [vmem:[%s200 + $0x8] sm:$0xff] %v203
                %v205 = vld [vmem:[%s199 + $0x10] sm:$0xff]
                %206 = vst [vmem:[%s200 + $0x10] sm:$0xff] %v205
                %v207 = vld [vmem:[%s199 + $0x18] sm:$0xff]
                %208 = vst [vmem:[%s200 + $0x18] sm:$0xff] %v207
                %v209 = vld [vmem:[%s199 + $0x40] sm:$0xff]
                %210 = vst [vmem:[%s200 + $0x20] sm:$0xff] %v209
                %v211 = vld [vmem:[%s199 + $0x48] sm:$0xff]
                %212 = vst [vmem:[%s200 + $0x28] sm:$0xff] %v211
                %v213 = vld [vmem:[%s199 + $0x50] sm:$0xff]
                %214 = vst [vmem:[%s200 + $0x30] sm:$0xff] %v213
                %v215 = vld [vmem:[%s199 + $0x58] sm:$0xff]
                %216 = vst [vmem:[%s200 + $0x38] sm:$0xff] %v215
                %v217 = vld [vmem:[%s199 + $0x80] sm:$0xff]
                %218 = vst [vmem:[%s200 + $0x40] sm:$0xff] %v217
                %v219 = vld [vmem:[%s199 + $0x88] sm:$0xff]
                %220 = vst [vmem:[%s200 + $0x48] sm:$0xff] %v219
                %v221 = vld [vmem:[%s199 + $0x90] sm:$0xff]
                %222 = vst [vmem:[%s200 + $0x50] sm:$0xff] %v221
                %v223 = vld [vmem:[%s199 + $0x98] sm:$0xff]
                %224 = vst [vmem:[%s200 + $0x58] sm:$0xff] %v223
                %v225 = vld [vmem:[%s199 + $0xc0] sm:$0xff]
                %226 = vst [vmem:[%s200 + $0x60] sm:$0xff] %v225
                %v227 = vld [vmem:[%s199 + $0xc8] sm:$0xff]
                %228 = vst [vmem:[%s200 + $0x68] sm:$0xff] %v227
                %v229 = vld [vmem:[%s199 + $0xd0] sm:$0xff]
                %230 = vst [vmem:[%s200 + $0x70] sm:$0xff] %v229
                %v231 = vld [vmem:[%s199 + $0xd8] sm:$0xff]
                %232 = vst [vmem:[%s200 + $0x78] sm:$0xff] %v231
                %v233 = vld [vmem:[%s199 + $0x100] sm:$0xff]
                %234 = vst [vmem:[%s200 + $0x80] sm:$0xff] %v233
                %v235 = vld [vmem:[%s199 + $0x108] sm:$0xff]
                %236 = vst [vmem:[%s200 + $0x88] sm:$0xff] %v235
                %v237 = vld [vmem:[%s199 + $0x110] sm:$0xff]
                %238 = vst [vmem:[%s200 + $0x90] sm:$0xff] %v237
                %v239 = vld [vmem:[%s199 + $0x118] sm:$0xff]
                %240 = vst [vmem:[%s200 + $0x98] sm:$0xff] %v239
                %v241 = vld [vmem:[%s199 + $0x140] sm:$0xff]
                %242 = vst [vmem:[%s200 + $0xa0] sm:$0xff] %v241
                %v243 = vld [vmem:[%s199 + $0x148] sm:$0xff]
                %244 = vst [vmem:[%s200 + $0xa8] sm:$0xff] %v243
                %v245 = vld [vmem:[%s199 + $0x150] sm:$0xff]
                %246 = vst [vmem:[%s200 + $0xb0] sm:$0xff] %v245
                %v247 = vld [vmem:[%s199 + $0x158] sm:$0xff]
                %248 = vst [vmem:[%s200 + $0xb8] sm:$0xff] %v247
                %v249 = vld [vmem:[%s199 + $0x180] sm:$0xff]
                %250 = vst [vmem:[%s200 + $0xc0] sm:$0xff] %v249
                %v251 = vld [vmem:[%s199 + $0x188] sm:$0xff]
                %252 = vst [vmem:[%s200 + $0xc8] sm:$0xff] %v251
                %v253 = vld [vmem:[%s199 + $0x190] sm:$0xff]
                %254 = vst [vmem:[%s200 + $0xd0] sm:$0xff] %v253
                %v255 = vld [vmem:[%s199 + $0x198] sm:$0xff]
                %256 = vst [vmem:[%s200 + $0xd8] sm:$0xff] %v255
                %v257 = vld [vmem:[%s199 + $0x1c0] sm:$0xff]
                %258 = vst [vmem:[%s200 + $0xe0] sm:$0xff] %v257
                %v259 = vld [vmem:[%s199 + $0x1c8] sm:$0xff]
                %260 = vst [vmem:[%s200 + $0xe8] sm:$0xff] %v259
                %v261 = vld [vmem:[%s199 + $0x1d0] sm:$0xff]
                %262 = vst [vmem:[%s200 + $0xf0] sm:$0xff] %v261
                %v263 = vld [vmem:[%s199 + $0x1d8] sm:$0xff]
                %264 = vst [vmem:[%s200 + $0xf8] sm:$0xff] %v263
                %v265 = vld [vmem:[%s199 + $0x200] sm:$0xff]
                %266 = vst [vmem:[%s200 + $0x100] sm:$0xff] %v265
                %v267 = vld [vmem:[%s199 + $0x208] sm:$0xff]
                %268 = vst [vmem:[%s200 + $0x108] sm:$0xff] %v267
                %v269 = vld [vmem:[%s199 + $0x210] sm:$0xff]
                %270 = vst [vmem:[%s200 + $0x110] sm:$0xff] %v269
                %v271 = vld [vmem:[%s199 + $0x218] sm:$0xff]
                %272 = vst [vmem:[%s200 + $0x118] sm:$0xff] %v271
                %v273 = vld [vmem:[%s199 + $0x240] sm:$0xff]
                %274 = vst [vmem:[%s200 + $0x120] sm:$0xff] %v273
                %v275 = vld [vmem:[%s199 + $0x248] sm:$0xff]
                %276 = vst [vmem:[%s200 + $0x128] sm:$0xff] %v275
                %v277 = vld [vmem:[%s199 + $0x250] sm:$0xff]
                %278 = vst [vmem:[%s200 + $0x130] sm:$0xff] %v277
                %v279 = vld [vmem:[%s199 + $0x258] sm:$0xff]
                %280 = vst [vmem:[%s200 + $0x138] sm:$0xff] %v279
                %v281 = vld [vmem:[%s199 + $0x280] sm:$0xff]
                %282 = vst [vmem:[%s200 + $0x140] sm:$0xff] %v281
                %v283 = vld [vmem:[%s199 + $0x288] sm:$0xff]
                %284 = vst [vmem:[%s200 + $0x148] sm:$0xff] %v283
                %v285 = vld [vmem:[%s199 + $0x290] sm:$0xff]
                %286 = vst [vmem:[%s200 + $0x150] sm:$0xff] %v285
                %v287 = vld [vmem:[%s199 + $0x298] sm:$0xff]
                %288 = vst [vmem:[%s200 + $0x158] sm:$0xff] %v287
                %v289 = vld [vmem:[%s199 + $0x2c0] sm:$0xff]
                %290 = vst [vmem:[%s200 + $0x160] sm:$0xff] %v289
                %v291 = vld [vmem:[%s199 + $0x2c8] sm:$0xff]
                %292 = vst [vmem:[%s200 + $0x168] sm:$0xff] %v291
                %v293 = vld [vmem:[%s199 + $0x2d0] sm:$0xff]
                %294 = vst [vmem:[%s200 + $0x170] sm:$0xff] %v293
                %v295 = vld [vmem:[%s199 + $0x2d8] sm:$0xff]
                %296 = vst [vmem:[%s200 + $0x178] sm:$0xff] %v295
                %v297 = vld [vmem:[%s199 + $0x300] sm:$0xff]
                %298 = vst [vmem:[%s200 + $0x180] sm:$0xff] %v297
                %v299 = vld [vmem:[%s199 + $0x308] sm:$0xff]
                %300 = vst [vmem:[%s200 + $0x188] sm:$0xff] %v299
                %v301 = vld [vmem:[%s199 + $0x310] sm:$0xff]
                %302 = vst [vmem:[%s200 + $0x190] sm:$0xff] %v301
                %v303 = vld [vmem:[%s199 + $0x318] sm:$0xff]
                %304 = vst [vmem:[%s200 + $0x198] sm:$0xff] %v303
                %v305 = vld [vmem:[%s199 + $0x340] sm:$0xff]
                %306 = vst [vmem:[%s200 + $0x1a0] sm:$0xff] %v305
                %v307 = vld [vmem:[%s199 + $0x348] sm:$0xff]
                %308 = vst [vmem:[%s200 + $0x1a8] sm:$0xff] %v307
                %v309 = vld [vmem:[%s199 + $0x350] sm:$0xff]
                %310 = vst [vmem:[%s200 + $0x1b0] sm:$0xff] %v309
                %v311 = vld [vmem:[%s199 + $0x358] sm:$0xff]
                %312 = vst [vmem:[%s200 + $0x1b8] sm:$0xff] %v311
                %v313 = vld [vmem:[%s199 + $0x380] sm:$0xff]
                %314 = vst [vmem:[%s200 + $0x1c0] sm:$0xff] %v313
                %v315 = vld [vmem:[%s199 + $0x388] sm:$0xff]
                %316 = vst [vmem:[%s200 + $0x1c8] sm:$0xff] %v315
                %v317 = vld [vmem:[%s199 + $0x390] sm:$0xff]
                %318 = vst [vmem:[%s200 + $0x1d0] sm:$0xff] %v317
                %v319 = vld [vmem:[%s199 + $0x398] sm:$0xff]
                %320 = vst [vmem:[%s200 + $0x1d8] sm:$0xff] %v319
                %v321 = vld [vmem:[%s199 + $0x3c0] sm:$0xff]
                %322 = vst [vmem:[%s200 + $0x1e0] sm:$0xff] %v321
                %v323 = vld [vmem:[%s199 + $0x3c8] sm:$0xff]
                %324 = vst [vmem:[%s200 + $0x1e8] sm:$0xff] %v323
                %v325 = vld [vmem:[%s199 + $0x3d0] sm:$0xff]
                %326 = vst [vmem:[%s200 + $0x1f0] sm:$0xff] %v325
                %v327 = vld [vmem:[%s199 + $0x3d8] sm:$0xff]
                %328 = vst [vmem:[%s200 + $0x1f8] sm:$0xff] %v327
              $region41: #{softmax_model_forward.1} parent=35 // loop_footer
                %s198 = sadd.s32 1, %s194
              $region42: #{softmax_model_forward.1} parent=35 // loop_footer_branch
                %193 = sbr.rel target = $region38
              $region43: #{softmax_model_forward.1} parent=35 // loop_exit
                _
            $region36: #{softmax_model_forward.1} parent=31 // pred_fallthru
              _
            // Predicated region
            $region44: #{softmax_model_forward.1} parent=31 // pred_check
              _
            $region45: #{softmax_model_forward.1} parent=31 // pred_check_branch
              %330 = sbr.rel target = $region47
            $region46: #{softmax_model_forward.1} parent=31 // pred_region
              _
            $region47: #{softmax_model_forward.1} parent=31 // pred_fallthru
              _
          $region32: #{softmax_model_forward.1} parent=27 // pred_fallthru
            _
          %331 = vnop
        $region28: #{softmax_model_forward.1} parent=19 // pred_fallthru
          _
      $region20: #{softmax_model_forward.1} parent=5 // pred_fallthru
        _
      %p332 = scmp.le.s32.totalorder 1, %s9
      %p333 = scmp.lt.s32.totalorder %s9, 3
      %p334 = pnand %p332, %p333
      %p335 = pneg %p334
      // Predicated region
      $region48: #{softmax_model_forward.1} parent=5 // pred_check
        _
      $region49: #{softmax_model_forward.1} parent=5 // pred_check_branch
        %337 = sbr.rel (%p334) target = $region51
      $region50: #{softmax_model_forward.1} parent=5 // pred_region
        %s338 = ssub.s32 %s9, 1
        %s339 = sand.u32 %s71, 1
        %s340 = sand.u32 %s71, 1
        %s341 = smul.addr %s340, 512
        %s342 = scalar_lea.vmem [#allocation3], %s341
        // Predicated region
        $region52: #{softmax_model_forward.1} parent=50 // pred_check
          %p343 = pneg %p84
        $region53: #{softmax_model_forward.1} parent=50 // pred_check_branch
          %345 = sbr.rel (%p343) target = $region55
        $region54: #{softmax_model_forward.1} parent=50 // pred_region
          _
        $region55: #{softmax_model_forward.1} parent=50 // pred_fallthru
          _
        %s346 = smul.u32 4, %s21
        %p347 = scmp.lt.s32.totalorder %s19, 0
        %s348 = scalar_select %p347, %s19, 0
        %p349 = scmp.lt.s32.totalorder %s346, 7
        %s350 = scalar_select %p349, %s346, 7
        %s351 = smul.addr %s348, 8
        %s352 = sadd.s32 %s350, %s351
        %s353 = smul.addr %s352, 8
        %s354 = scalar_lea.vmem %s0, %s353
        %p355 = pneg %p56
        %p356 = pneg %p53
        %s357 = sand.u32 %s71, 1
        %s358 = sand.u32 %s71, 1
        %s359 = smul.addr %s358, 512
        %s360 = scalar_lea.vmem [#allocation3], %s359
        %p361 = pneg %p84
        %p362 = pneg %p81
        %p363 = scmp.lt.s32.totalorder %s20, 0
        %s364 = scalar_select %p363, %s20, 0
        %s365 = scalar_lea.vmem %s2, %s364
        %p366 = pneg %p110
        %p367 = pneg %p107
        %p368 = pneg %p138
        %p369 = pneg %p135
        %p370 = scmp.lt.s32.totalorder %s19, 0
        %s371 = scalar_select %p370, %s19, 0
        %p372 = scmp.lt.s32.totalorder %s20, 0
        %s373 = scalar_select %p372, %s20, 0
        %s374 = sadd.s32 %s373, %s371
        %s375 = smul.addr %s374, 8
        %s376 = scalar_lea.vmem %s3, %s375
        %s377 = smul.u32 4, %s21
        %p378 = scmp.lt.s32.totalorder %s19, 0
        %s379 = scalar_select %p378, %s19, 0
        %p380 = scmp.lt.s32.totalorder %s377, 7
        %s381 = scalar_select %p380, %s377, 7
        %s382 = smul.addr %s379, 8
        %s383 = sadd.s32 %s381, %s382
        %s384 = smul.addr %s383, 8
        %s385 = scalar_lea.vmem %s0, %s384
        %s386 = smul.u32 4, %s21
        %s387 = smul.u32 16, %s20
        %s388 = smul.u32 4, %s21
        %p389 = scmp.lt.s32.totalorder %s20, 0
        %s390 = scalar_select %p389, %s20, 0
        %s391 = scalar_lea.vmem %s2, %s390
        %p392 = scmp.lt.s32.totalorder %s19, 0
        %s393 = scalar_select %p392, %s19, 0
        %p394 = scmp.lt.s32.totalorder %s20, 0
        %s395 = scalar_select %p394, %s20, 0
        %s396 = sadd.s32 %s395, %s393
        %s397 = smul.addr %s396, 8
        %s398 = scalar_lea.vmem %s3, %s397
        %p399 = scmp.eq.s32.totalorder %s21, 0
        // Predicated region
        $region56: #{softmax_model_forward.1} parent=50 // pred_check
          %p400 = pneg %p399
        $region57: #{softmax_model_forward.1} parent=50 // pred_check_branch
          %402 = sbr.rel (%p400) target = $region59
        $region58: #{softmax_model_forward.1} parent=50 // pred_region
          %403 = vst [vmem:[#allocation2] sm:$0xff] 0.0
        $region59: #{softmax_model_forward.1} parent=50 // pred_fallthru
          _
        %v404 = vld [vmem:[#allocation2] sm:$0xff]
        %v405 = vld [vmem:[%s385] sm:$0xff]
        %v406 = vld [vmem:[%s385 + $0x8] sm:$0xff]
        %v407 = vld [vmem:[%s385 + $0x10] sm:$0xff]
        %v408 = vld [vmem:[%s385 + $0x18] sm:$0xff]
        %v409 = vld [vmem:[%s342] sm:$0xff]
        %v410 = vld [vmem:[%s342 + $0x8] sm:$0xff]
        %v411 = vld [vmem:[%s342 + $0x10] sm:$0xff]
        %v412 = vld [vmem:[%s342 + $0x18] sm:$0xff]
        %v413 = vld [vmem:[%s342 + $0x20] sm:$0xff]
        %v414 = vld [vmem:[%s342 + $0x28] sm:$0xff]
        %v415 = vld [vmem:[%s342 + $0x30] sm:$0xff]
        %v416 = vld [vmem:[%s342 + $0x38] sm:$0xff]
        %v417 = vld [vmem:[%s342 + $0x40] sm:$0xff]
        %v418 = vld [vmem:[%s342 + $0x48] sm:$0xff]
        %v419 = vld [vmem:[%s342 + $0x50] sm:$0xff]
        %v420 = vld [vmem:[%s342 + $0x58] sm:$0xff]
        %v421 = vld [vmem:[%s342 + $0x60] sm:$0xff]
        %v422 = vld [vmem:[%s342 + $0x68] sm:$0xff]
        %v423 = vld [vmem:[%s342 + $0x70] sm:$0xff]
        %v424 = vld [vmem:[%s342 + $0x78] sm:$0xff]
        %v425 = vld [vmem:[%s342 + $0x80] sm:$0xff]
        %v426 = vld [vmem:[%s342 + $0x88] sm:$0xff]
        %v427 = vld [vmem:[%s342 + $0x90] sm:$0xff]
        %v428 = vld [vmem:[%s342 + $0x98] sm:$0xff]
        %v429 = vld [vmem:[%s342 + $0xa0] sm:$0xff]
        %v430 = vld [vmem:[%s342 + $0xa8] sm:$0xff]
        %v431 = vld [vmem:[%s342 + $0xb0] sm:$0xff]
        %v432 = vld [vmem:[%s342 + $0xb8] sm:$0xff]
        %v433 = vld [vmem:[%s342 + $0xc0] sm:$0xff]
        %v434 = vld [vmem:[%s342 + $0xc8] sm:$0xff]
        %v435 = vld [vmem:[%s342 + $0xd0] sm:$0xff]
        %v436 = vld [vmem:[%s342 + $0xd8] sm:$0xff]
        %v437 = vld [vmem:[%s342 + $0xe0] sm:$0xff]
        %v438 = vld [vmem:[%s342 + $0xe8] sm:$0xff]
        %v439 = vld [vmem:[%s342 + $0xf0] sm:$0xff]
        %v440 = vld [vmem:[%s342 + $0xf8] sm:$0xff]
        %v441 = vld [vmem:[%s342 + $0x100] sm:$0xff]
        %v442 = vld [vmem:[%s342 + $0x108] sm:$0xff]
        %v443 = vld [vmem:[%s342 + $0x110] sm:$0xff]
        %v444 = vld [vmem:[%s342 + $0x118] sm:$0xff]
        %v445 = vld [vmem:[%s342 + $0x120] sm:$0xff]
        %v446 = vld [vmem:[%s342 + $0x128] sm:$0xff]
        %v447 = vld [vmem:[%s342 + $0x130] sm:$0xff]
        %v448 = vld [vmem:[%s342 + $0x138] sm:$0xff]
        %v449 = vld [vmem:[%s342 + $0x140] sm:$0xff]
        %v450 = vld [vmem:[%s342 + $0x148] sm:$0xff]
        %v451 = vld [vmem:[%s342 + $0x150] sm:$0xff]
        %v452 = vld [vmem:[%s342 + $0x158] sm:$0xff]
        %v453 = vld [vmem:[%s342 + $0x160] sm:$0xff]
        %v454 = vld [vmem:[%s342 + $0x168] sm:$0xff]
        %v455 = vld [vmem:[%s342 + $0x170] sm:$0xff]
        %v456 = vld [vmem:[%s342 + $0x178] sm:$0xff]
        %v457 = vld [vmem:[%s342 + $0x180] sm:$0xff]
        %v458 = vld [vmem:[%s342 + $0x188] sm:$0xff]
        %v459 = vld [vmem:[%s342 + $0x190] sm:$0xff]
        %v460 = vld [vmem:[%s342 + $0x198] sm:$0xff]
        %v461 = vld [vmem:[%s342 + $0x1a0] sm:$0xff]
        %v462 = vld [vmem:[%s342 + $0x1a8] sm:$0xff]
        %v463 = vld [vmem:[%s342 + $0x1b0] sm:$0xff]
        %v464 = vld [vmem:[%s342 + $0x1b8] sm:$0xff]
        %v465 = vld [vmem:[%s342 + $0x1c0] sm:$0xff]
        %v466 = vld [vmem:[%s342 + $0x1c8] sm:$0xff]
        %v467 = vld [vmem:[%s342 + $0x1d0] sm:$0xff]
        %v468 = vld [vmem:[%s342 + $0x1d8] sm:$0xff]
        %v469 = vld [vmem:[%s342 + $0x1e0] sm:$0xff]
        %v470 = vld [vmem:[%s342 + $0x1e8] sm:$0xff]
        %v471 = vld [vmem:[%s342 + $0x1f0] sm:$0xff]
        %v472 = vld [vmem:[%s342 + $0x1f8] sm:$0xff]
        %473 = vmatpush.xpose.msra.mxu0 %v469
        %474 = vmatpush.xpose.msra.mxu0 %v465
        %475 = vmatpush.xpose.msra.mxu0 %v461
        %476 = vmatpush.xpose.msra.mxu0 %v457
        %477 = vmatpush.xpose.msra.mxu0 %v453
        %478 = vmatpush.xpose.msra.mxu0 %v449
        %479 = vmatpush.xpose.msra.mxu0 %v445
        %480 = vmatpush.xpose.msra.mxu0 %v441
        %481 = vmatpush.xpose.msra.mxu0 %v437
        %482 = vmatpush.xpose.msra.mxu0 %v433
        %483 = vmatpush.xpose.msra.mxu0 %v429
        %484 = vmatpush.xpose.msra.mxu0 %v425
        %485 = vmatpush.xpose.msra.mxu0 %v421
        %486 = vmatpush.xpose.msra.mxu0 %v417
        %487 = vmatpush.xpose.msra.mxu0 %v413
        %488 = vmatpush.xpose.msra.mxu0 %v409
        %489 = vmatmul.f32.gmra.mxu0 %v405
        %v490 = vpop.f32.mrf.mxu0
        %v491 = vadd.f32 0.0, %v490
        %492 = vdwg.mxu0
        %493 = vmatpush.xpose.msra.mxu0 %v470
        %494 = vmatpush.xpose.msra.mxu0 %v466
        %495 = vmatpush.xpose.msra.mxu0 %v462
        %496 = vmatpush.xpose.msra.mxu0 %v458
        %497 = vmatpush.xpose.msra.mxu0 %v454
        %498 = vmatpush.xpose.msra.mxu0 %v450
        %499 = vmatpush.xpose.msra.mxu0 %v446
        %500 = vmatpush.xpose.msra.mxu0 %v442
        %501 = vmatpush.xpose.msra.mxu0 %v438
        %502 = vmatpush.xpose.msra.mxu0 %v434
        %503 = vmatpush.xpose.msra.mxu0 %v430
        %504 = vmatpush.xpose.msra.mxu0 %v426
        %505 = vmatpush.xpose.msra.mxu0 %v422
        %506 = vmatpush.xpose.msra.mxu0 %v418
        %507 = vmatpush.xpose.msra.mxu0 %v414
        %508 = vmatpush.xpose.msra.mxu0 %v410
        %509 = vmatmul.f32.gmra.mxu0 %v406
        %v510 = vpop.f32.mrf.mxu0
        %v511 = vadd.f32 %v491, %v510
        %512 = vdwg.mxu0
        %513 = vmatpush.xpose.msra.mxu0 %v471
        %514 = vmatpush.xpose.msra.mxu0 %v467
        %515 = vmatpush.xpose.msra.mxu0 %v463
        %516 = vmatpush.xpose.msra.mxu0 %v459
        %517 = vmatpush.xpose.msra.mxu0 %v455
        %518 = vmatpush.xpose.msra.mxu0 %v451
        %519 = vmatpush.xpose.msra.mxu0 %v447
        %520 = vmatpush.xpose.msra.mxu0 %v443
        %521 = vmatpush.xpose.msra.mxu0 %v439
        %522 = vmatpush.xpose.msra.mxu0 %v435
        %523 = vmatpush.xpose.msra.mxu0 %v431
        %524 = vmatpush.xpose.msra.mxu0 %v427
        %525 = vmatpush.xpose.msra.mxu0 %v423
        %526 = vmatpush.xpose.msra.mxu0 %v419
        %527 = vmatpush.xpose.msra.mxu0 %v415
        %528 = vmatpush.xpose.msra.mxu0 %v411
        %529 = vmatmul.f32.gmra.mxu0 %v407
        %v530 = vpop.f32.mrf.mxu0
        %v531 = vadd.f32 %v511, %v530
        %532 = vdwg.mxu0
        %533 = vmatpush.xpose.msra.mxu0 %v472
        %534 = vmatpush.xpose.msra.mxu0 %v468
        %535 = vmatpush.xpose.msra.mxu0 %v464
        %536 = vmatpush.xpose.msra.mxu0 %v460
        %537 = vmatpush.xpose.msra.mxu0 %v456
        %538 = vmatpush.xpose.msra.mxu0 %v452
        %539 = vmatpush.xpose.msra.mxu0 %v448
        %540 = vmatpush.xpose.msra.mxu0 %v444
        %541 = vmatpush.xpose.msra.mxu0 %v440
        %542 = vmatpush.xpose.msra.mxu0 %v436
        %543 = vmatpush.xpose.msra.mxu0 %v432
        %544 = vmatpush.xpose.msra.mxu0 %v428
        %545 = vmatpush.xpose.msra.mxu0 %v424
        %546 = vmatpush.xpose.msra.mxu0 %v420
        %547 = vmatpush.xpose.msra.mxu0 %v416
        %548 = vmatpush.xpose.msra.mxu0 %v412
        %549 = vmatmul.f32.gmra.mxu0 %v408
        %v550 = vpop.f32.mrf.mxu0
        %v551 = vadd.f32 %v531, %v550
        %552 = vdwg.mxu0
        %v553 = vadd.f32 %v404, %v551
        %554 = vst [vmem:[#allocation2] sm:$0xff] %v553
        %p555 = scmp.eq.s32.totalorder %s21, 1
        // Predicated region
        $region60: #{softmax_model_forward.1} parent=50 // pred_check
          %p556 = pneg %p555
        $region61: #{softmax_model_forward.1} parent=50 // pred_check_branch
          %558 = sbr.rel (%p556) target = $region63
        $region62: #{softmax_model_forward.1} parent=50 // pred_region
          %v559 = vld [vmem:[#allocation2] sm:$0xff]
          %v560 = vld [vmem:[%s391] sm:$0x1]
          %v562 = vperm.slane %v560, 0
          %v564 = vadd.f32 %v559, %v562
          %565 = vst [vmem:[%s398] sm:$0xff] %v564
        $region63: #{softmax_model_forward.1} parent=50 // pred_fallthru
          _
        %p566 = scmp.lt.s32.totalorder %s19, 0
        %s567 = scalar_select %p566, %s19, 0
        %p568 = scmp.lt.s32.totalorder %s20, 0
        %s569 = scalar_select %p568, %s20, 0
        %s570 = sadd.s32 %s569, %s567
        %s571 = smul.addr %s570, 8
        %s572 = scalar_lea.vmem %s3, %s571
        // Predicated region
        $region64: #{softmax_model_forward.1} parent=50 // pred_check
          %p573 = pneg %p135
        $region65: #{softmax_model_forward.1} parent=50 // pred_check_branch
          %575 = sbr.rel (%p573) target = $region67
        $region66: #{softmax_model_forward.1} parent=50 // pred_region
          _
        $region67: #{softmax_model_forward.1} parent=50 // pred_fallthru
          _
        // Predicated region
        $region68: #{softmax_model_forward.1} parent=50 // pred_check
          %p576 = pneg %p135
        $region69: #{softmax_model_forward.1} parent=50 // pred_check_branch
          %578 = sbr.rel (%p576) target = $region71
        $region70: #{softmax_model_forward.1} parent=50 // pred_region
          %p579 = scmp.lt.s32.totalorder %s19, 0
          %s580 = scalar_select %p579, %s19, 0
          %p581 = scmp.lt.s32.totalorder %s20, 0
          %s582 = scalar_select %p581, %s20, 0
          %s583 = sadd.s32 %s582, %s580
          %s584 = smul.addr %s583, 8
          %s585 = scalar_lea.vmem %s3, %s584
        $region71: #{softmax_model_forward.1} parent=50 // pred_fallthru
          _
      $region51: #{softmax_model_forward.1} parent=5 // pred_fallthru
        _
      %p586 = scmp.le.s32.totalorder 2, %s9
      // Predicated region
      $region72: #{softmax_model_forward.1} parent=5 // pred_check
        %p587 = pneg %p586
      $region73: #{softmax_model_forward.1} parent=5 // pred_check_branch
        %589 = sbr.rel (%p587) target = $region75
      $region74: #{softmax_model_forward.1} parent=5 // pred_region
        %s590 = ssub.s32 %s9, 2
      $region75: #{softmax_model_forward.1} parent=5 // pred_fallthru
        _
    $region6: #{softmax_model_forward.1} parent=1 // loop_footer
      %s13 = sadd.s32 1, %s9
    $region7: #{softmax_model_forward.1} parent=1 // loop_footer_branch
      %8 = sbr.rel target = $region3
    $region8: #{softmax_model_forward.1} parent=1 // loop_exit
      _

</llo_original>
